<compile_context>
chip_gen: v5e
topology: v5e:2x2
jax: 0.10.0
libtpu: 0.0.40
codegen_flags: <defaults>
</compile_context>

<pallas_src>
import functools

import jax
import jax.numpy as jnp
from jax import lax
from jax.experimental import pallas as pl
from jax.experimental.pallas import tpu as pltpu


def _round_up(x, m):
    return ((x + m - 1) // m) * m


def _pick_token_tile(n, row_bytes, budget_bytes=4 << 20):
    """Token-axis tile size: use the full axis if it fits the per-buffer budget,
    otherwise the largest multiple-of-8 tile whose slab stays inside it
    (>= 512 rows whenever the row is narrow). Returns (tile, padded_n)."""
    t = max(8, min(2048, (budget_bytes // max(row_bytes, 1)) // 8 * 8))
    if n <= t:
        return n, n                      # full-axis block (exempt from mult-of-8 rule)
    return t, _round_up(n, t)


# ----------------------------------------------------------------------------
# Kernel 1: mean over the token axis (batch is None path)
#   grid = (B tiles [parallel], N tiles [arbitrary, reduction])
# ----------------------------------------------------------------------------
def _token_mean_kernel(x_ref, o_ref, acc_ref, *, inv_n):
    step = pl.program_id(1)

    @pl.when(step == 0)
    def _():
        acc_ref[...] = jnp.zeros_like(acc_ref)

    # Accumulate in f32 regardless of the input dtype (bf16-safe).
    acc_ref[...] += jnp.sum(x_ref[...].astype(jnp.float32), axis=1)

    @pl.when(step == pl.num_programs(1) - 1)
    def _():
        o_ref[...] = (acc_ref[...] * inv_n).astype(o_ref.dtype)


def token_mean(x):
    """x: (B, N, D) -> (B, D), mean over dim=1."""
    B, N, D = x.shape
    orig_b = B
    inv_n = 1.0 / float(N)

    # Batch tile (leading dim of the x block; sublane dim of the output block).
    if B <= 8:
        tb = B
    else:
        tb = 8
        pad_b = _round_up(B, tb) - B
        if pad_b:
            x = jnp.pad(x, ((0, pad_b), (0, 0), (0, 0)))
        B += pad_b

    # Token tile (reduction axis) — zero padding does not change the sum.
    row_bytes = tb * D * x.dtype.itemsize
    tn, n_pad = _pick_token_tile(N, row_bytes)
    if n_pad != N:
        x = jnp.pad(x, ((0, 0), (0, n_pad - N), (0, 0)))

    grid = (B // tb, n_pad // tn)

    in_tile = tb * tn * D * x.dtype.itemsize
    out_tile = tb * D * x.dtype.itemsize
    vmem_limit = int(min(32 << 20,
                         max(8 << 20,
                             2 * in_tile + 2 * out_tile + tb * D * 4 + (2 << 20))))

    out = pl.pallas_call(
        functools.partial(_token_mean_kernel, inv_n=inv_n),
        out_shape=jax.ShapeDtypeStruct((B, D), x.dtype),
        grid_spec=pltpu.PrefetchScalarGridSpec(
            num_scalar_prefetch=0,
            grid=grid,
            in_specs=[pl.BlockSpec((tb, tn, D), lambda b, n: (b, n, 0))],
            out_specs=pl.BlockSpec((tb, D), lambda b, n: (b, 0)),
            scratch_shapes=[pltpu.VMEM((tb, D), jnp.float32)],
        ),
        compiler_params=pltpu.CompilerParams(
            dimension_semantics=("parallel", "arbitrary"),
            vmem_limit_bytes=vmem_limit,
        ),
    )(x)
    return out[:orig_b]


# ----------------------------------------------------------------------------
# Kernel 2: scatter_mean over dim=0 (batch is not None path)
#   grid = (D tiles [parallel], N tiles [arbitrary, reduction])
#   Per token-tile a small (S_pad, tn) one-hot is built and fed to the MXU
#   (S padded to a sublane multiple); sums and counts live in f32 scratch.
#   Empty segments produce 0 rows (matches torch_scatter.scatter_mean).
#   Ids are assumed to lie in [0, num_segments); out-of-range ids are dropped.
# ----------------------------------------------------------------------------
def _scatter_mean_kernel(seg_ref, x_ref, o_ref, acc_ref, cnt_ref):
    step = pl.program_id(1)

    @pl.when(step == 0)
    def _():
        acc_ref[...] = jnp.zeros_like(acc_ref)
        cnt_ref[...] = jnp.zeros_like(cnt_ref)

    seg = seg_ref[...]                                            # (1, tn) int32
    s_pad = acc_ref.shape[0]
    tn = seg.shape[1]
    mask = lax.broadcasted_iota(jnp.int32, (s_pad, tn), 0) == seg  # (s_pad, tn)

    # Segment sums: one-hot (in x's dtype -> native bf16 MXU path when x is bf16),
    # f32 accumulation. The one-hot only ever exists at (s_pad, tn) tile size.
    onehot = mask.astype(x_ref.dtype)
    acc_ref[...] += jnp.dot(onehot, x_ref[...], preferred_element_type=jnp.float32)
    # Counts accumulated exactly in f32.
    cnt_ref[...] += jnp.sum(mask.astype(jnp.float32), axis=1, keepdims=True)

    @pl.when(step == pl.num_programs(1) - 1)
    def _():
        cnt = cnt_ref[...]
        inv = pl.reciprocal(jnp.maximum(cnt, 1.0), approx=True)    # EUP, off the VPU
        o_ref[...] = jnp.where(cnt > 0.0, acc_ref[...] * inv, 0.0).astype(o_ref.dtype)


def scatter_mean(x, batch, num_segments):
    """x: (N, D), batch: (N,) int ids -> (num_segments, D) segment means."""
    N, D = x.shape
    orig_d = D
    S = int(num_segments)
    s_pad = max(8, _round_up(S, 8))

    # Hidden-dim tile ("parallel" grid axis; splits across TensorCores on v7x).
    if D <= 512:
        td = D
    else:
        td = 512
        pad_d = _round_up(D, td) - D
        if pad_d:
            x = jnp.pad(x, ((0, 0), (0, pad_d)))
        D += pad_d

    # Token tile (reduction axis).
    row_bytes = td * x.dtype.itemsize
    tn, n_pad = _pick_token_tile(N, row_bytes)
    seg = batch.astype(jnp.int32)
    if n_pad != N:
        # Padded tokens get an out-of-range id so they hit no segment row.
        x = jnp.pad(x, ((0, n_pad - N), (0, 0)))
        seg = jnp.pad(seg, (0, n_pad - N), constant_values=s_pad)
    seg2d = seg.reshape(1, n_pad)

    grid = (D // td, n_pad // tn)

    in_tile = tn * td * x.dtype.itemsize
    out_tile = s_pad * td * x.dtype.itemsize
    vmem_limit = int(min(32 << 20,
                         max(8 << 20,
                             2 * in_tile + 2 * out_tile
                             + s_pad * (td + 128) * 4 + (2 << 20))))

    out = pl.pallas_call(
        _scatter_mean_kernel,
        out_shape=jax.ShapeDtypeStruct((s_pad, D), x.dtype),
        grid_spec=pltpu.PrefetchScalarGridSpec(
            num_scalar_prefetch=0,
            grid=grid,
            in_specs=[
                pl.BlockSpec((1, tn), lambda d, n: (0, n)),    # segment ids
                pl.BlockSpec((tn, td), lambda d, n: (n, d)),   # node features
            ],
            out_specs=pl.BlockSpec((s_pad, td), lambda d, n: (0, d)),
            scratch_shapes=[
                pltpu.VMEM((s_pad, td), jnp.float32),          # segment sums
                pltpu.VMEM((s_pad, 1), jnp.float32),           # segment counts
            ],
        ),
        compiler_params=pltpu.CompilerParams(
            dimension_semantics=("parallel", "arbitrary"),
            vmem_limit_bytes=vmem_limit,
        ),
    )(seg2d, x)
    return out[:S, :orig_d]


# ----------------------------------------------------------------------------
# Module wrapper mirroring TokenAggregator.forward
# ----------------------------------------------------------------------------
def token_aggregator_forward(x, batch=None, num_segments=None):
    if batch is not None:
        return scatter_mean(x, batch, num_segments)
    return token_mean(x)


if __name__ == "__main__":
    key = jax.random.PRNGKey(0)
    k1, k2 = jax.random.split(key)

    # ---- dense path: x[B, N, D], mean over dim=1 ----
    B, N, D = 2, 8, 32
    x = jax.random.normal(k1, (B, N, D), dtype=jnp.float32)
    out = jax.block_until_ready(token_aggregator_forward(x))
    ref = jnp.mean(x, axis=1)
    assert out.shape == (B, D)
    assert jnp.allclose(out, ref, atol=1e-5, rtol=1e-5)

    # ---- scatter path: x[N, D] nodes, batch[N] segment ids ----
    Nn, S = 16, 2
    xn = jax.random.normal(k2, (Nn, D), dtype=jnp.float32)
    batch_ids = jnp.array([0] * 7 + [1] * 9, dtype=jnp.int32)
    out2 = jax.block_until_ready(
        token_aggregator_forward(xn, batch=batch_ids, num_segments=S)
    )
    ref2 = jnp.stack(
        [
            jnp.sum(jnp.where((batch_ids == s)[:, None], xn, 0.0), axis=0)
            / jnp.maximum(jnp.sum(batch_ids == s), 1)
            for s in range(S)
        ]
    )
    assert out2.shape == (S, D)
    # tolerance accounts for the EUP approximate reciprocal in the normalization
    assert jnp.allclose(out2, ref2, atol=5e-3, rtol=5e-3)

    print("KERNEL_OK")
</pallas_src>

<mosaic_0001>
module attributes {stable_mosaic.version = 11 : i64} {
  func.func @_token_mean_kernel(%arg0: i32, %arg1: i32, %arg2: memref<2x8x32xf32, #tpu.memory_space<vmem>>, %arg3: memref<2x32xf32, #tpu.memory_space<vmem>>, %arg4: memref<2x32xf32, #tpu.memory_space<vmem>>) attributes {dimension_semantics = [#tpu.dimension_semantics<parallel>, #tpu.dimension_semantics<arbitrary>], iteration_bounds = array<i64: 1, 1>, scalar_prefetch = 0 : i64, scratch_operands = 1 : i64, tpu.core_type = #tpu.core_type<tc>, window_params = [{transform_indices = @transform_0, window_bounds = array<i64: 2, 8, 32>}, {transform_indices = @transform_1, window_bounds = array<i64: 2, 32>}]} {
    %c0_i32 = arith.constant 0 : i32
    %0 = arith.cmpi eq, %arg1, %c0_i32 : i32
    %1 = arith.extui %0 : i1 to i32
    %c0_i32_0 = arith.constant 0 : i32
    %2 = arith.cmpi ne, %1, %c0_i32_0 : i32
    scf.if %2 {
      %cst_9 = arith.constant 0.000000e+00 : f32
      %11 = vector.broadcast %cst_9 : f32 to vector<2x32xf32>
      %c0_10 = arith.constant 0 : index
      %c0_11 = arith.constant 0 : index
      %12 = vector.load %arg4[%c0_10, %c0_11] : memref<2x32xf32, #tpu.memory_space<vmem>>, vector<2x32xf32>
      tpu.vector_store %arg4[%c0_10, %c0_11], %11 {strides = array<i32>} : memref<2x32xf32, #tpu.memory_space<vmem>>, vector<2x32xf32>,
    } else {
    }
    %c0 = arith.constant 0 : index
    %c0_1 = arith.constant 0 : index
    %3 = vector.load %arg4[%c0, %c0_1] : memref<2x32xf32, #tpu.memory_space<vmem>>, vector<2x32xf32>
    %c0_2 = arith.constant 0 : index
    %c0_3 = arith.constant 0 : index
    %c0_4 = arith.constant 0 : index
    %4 = vector.load %arg2[%c0_2, %c0_3, %c0_4] : memref<2x8x32xf32, #tpu.memory_space<vmem>>, vector<2x8x32xf32>
    %cst = arith.constant dense<0.000000e+00> : vector<2x32xf32>
    %5 = vector.multi_reduction <add>, %4, %cst [1] : vector<2x8x32xf32> to vector<2x32xf32>
    %6 = arith.addf %3, %5 : vector<2x32xf32>
    %c0_5 = arith.constant 0 : index
    %c0_6 = arith.constant 0 : index
    %7 = vector.load %arg4[%c0_5, %c0_6] : memref<2x32xf32, #tpu.memory_space<vmem>>, vector<2x32xf32>
    tpu.vector_store %arg4[%c0_5, %c0_6], %6 {strides = array<i32>} : memref<2x32xf32, #tpu.memory_space<vmem>>, vector<2x32xf32>,
    %c0_i32_7 = arith.constant 0 : i32
    %8 = arith.cmpi eq, %arg1, %c0_i32_7 : i32
    %9 = arith.extui %8 : i1 to i32
    %c0_i32_8 = arith.constant 0 : i32
    %10 = arith.cmpi ne, %9, %c0_i32_8 : i32
    scf.if %10 {
      %c0_9 = arith.constant 0 : index
      %c0_10 = arith.constant 0 : index
      %11 = vector.load %arg4[%c0_9, %c0_10] : memref<2x32xf32, #tpu.memory_space<vmem>>, vector<2x32xf32>
      %cst_11 = arith.constant 1.250000e-01 : f32
      %12 = vector.broadcast %cst_11 : f32 to vector<2x32xf32>
      %13 = arith.mulf %11, %12 : vector<2x32xf32>
      %c0_12 = arith.constant 0 : index
      %c0_13 = arith.constant 0 : index
      %14 = vector.load %arg3[%c0_12, %c0_13] : memref<2x32xf32, #tpu.memory_space<vmem>>, vector<2x32xf32>
      tpu.vector_store %arg3[%c0_12, %c0_13], %13 {strides = array<i32>} : memref<2x32xf32, #tpu.memory_space<vmem>>, vector<2x32xf32>,
    } else {
    }
    return
  }
  func.func @transform_0(%arg0: i32, %arg1: i32) -> (i32, i32, i32) {
    %c0_i32 = arith.constant 0 : i32
    %c0_i32_0 = arith.constant 0 : i32
    return %arg0, %arg1, %c0_i32 : i32, i32, i32
  }
  func.func @transform_1(%arg0: i32, %arg1: i32) -> (i32, i32) {
    %c0_i32 = arith.constant 0 : i32
    %c0_i32_0 = arith.constant 0 : i32
    return %arg0, %c0_i32 : i32, i32
  }
}

</mosaic_0001>

<llo_original>
// kernel: tpu_custom_call.1
$region0: #{tpu_custom_call.1}
  #allocation0 [shape = 'u32[]', space=smem, size = 0x4, offset = 0x4, fixed_abs, tag = 'smem constant byte address 0x4 - core index']
  #allocation1 [shape = 'u32[72,128]{1,0:T(1,128)}', space=vmem, size = 0x9000, scoped, tag = 'internal scratch']
  #allocation2 [shape = 'f32[2,32]{1,0:T(2,128)}', space=vmem, size = 0x400, scoped, tag = 'scratch operand']
  %s0 = inlined_call_operand.hbm [shape: f32[2,8,32], index: 0, kind: input, shape index: {}]
  %s1 = inlined_call_operand.hbm [shape: f32[2,32], index: 1, kind: output, shape index: {}]
  %s2 = sld [smem:[#allocation0]]
  $region26: #{tpu_custom_call.1} parent=0
    _
  %s4 = ssub.s32 1, %s2
  %s5 = scalar_select 0, %s4, %s2
  $region1: #{tpu_custom_call.1} parent=0
    #allocation3 [shape = 'u8[8192]{0}', space=vmem, size = 0x2000, scoped, tag = 'input window, operand 0, single buffered']
    #allocation4 [shape = 's32[1]{0}', space=sflag, size = 0x4, scoped, tag = 'scoped memory for tpu_custom_call.1']
    #allocation5 [shape = 's32[1]{0}', space=sflag, size = 0x4, scoped, tag = 'scoped memory for tpu_custom_call.1']
    #allocation6 [shape = 'u8[1024]{0}', space=vmem, size = 0x400, scoped, tag = 'output window, operand 0, single buffered']
    %6 = vsyncpa [#allocation4], 0
    %7 = vsyncpa [#allocation5], 0
    // Predicated region
    $region2: #{tpu_custom_call.1} parent=1 // pred_check
      _
    $region3: #{tpu_custom_call.1} parent=1 // pred_check_branch
      %9 = sbr.rel (0) target = $region5
    $region4: #{tpu_custom_call.1} parent=1 // pred_region
      %11 = vsyncadd [#allocation4], 0
      %s12 = sshll.u32 %s0, 4
      %s13 = int_to_ptr.hbm [resolvable:$true] %s12
      %s14 = sshll.u32 [#allocation3], 4
      %s15 = int_to_ptr.vmem [resolvable:$true] %s14
      %20 = dma.hbm_to_vmem [thread:$0]  %s13, 256, %s15, [#allocation4], 128, 128, 8
    $region5: #{tpu_custom_call.1} parent=1 // pred_fallthru
      _
    // Predicated region
    $region6: #{tpu_custom_call.1} parent=1 // pred_check
      _
    $region7: #{tpu_custom_call.1} parent=1 // pred_check_branch
      %22 = sbr.rel (0) target = $region9
    $region8: #{tpu_custom_call.1} parent=1 // pred_region
      %24 = dma.done [#allocation4], 256
    $region9: #{tpu_custom_call.1} parent=1 // pred_fallthru
      _
    %p25 = scmp.eq.s32.totalorder 0, 0
    // Predicated region
    $region10: #{tpu_custom_call.1} parent=1 // pred_check
      %p26 = pneg %p25
    $region11: #{tpu_custom_call.1} parent=1 // pred_check_branch
      %28 = sbr.rel (%p26) target = $region13
    $region12: #{tpu_custom_call.1} parent=1 // pred_region
      %vm29 = vcmask 254976
      %30 = vst.msk [vmem:[#allocation2] sm:$0x3] %vm29, 0.0
    $region13: #{tpu_custom_call.1} parent=1 // pred_fallthru
      _
    %v31 = vld [vmem:[#allocation2] sm:$0x3]
    %v32 = vld [vmem:[#allocation3] sm:$0xff]
    %v33 = vld [vmem:[#allocation3 + $0x8] sm:$0xff]
    %vm34 = vcmask 261120
    %v35 = vsel %vm34, %v32, 0.0
    %v36 = vrot.slane %v35, 4
    %v37 = vadd.f32 %v35, %v36
    %v38 = vrot.slane %v37, 2
    %v39 = vadd.f32 %v37, %v38
    %v40 = vrot.slane %v39, 1
    %v41 = vadd.f32 %v39, %v40
    %v42 = vsel %vm34, %v33, 0.0
    %v43 = vrot.slane %v42, 4
    %v44 = vadd.f32 %v42, %v43
    %v45 = vrot.slane %v44, 2
    %v46 = vadd.f32 %v44, %v45
    %v47 = vrot.slane %v46, 1
    %v48 = vadd.f32 %v46, %v47
    %vm51 = vcmask 1041409
    %v52 = vsel %vm51, %v48, %v41
    %v54 = vadd.f32 %v31, %v52
    %vm55 = vcmask 254976
    %56 = vst.msk [vmem:[#allocation2] sm:$0x3] %vm55, %v54
    // Predicated region
    $region14: #{tpu_custom_call.1} parent=1 // pred_check
      %p57 = pneg %p25
    $region15: #{tpu_custom_call.1} parent=1 // pred_check_branch
      %59 = sbr.rel (%p57) target = $region17
    $region16: #{tpu_custom_call.1} parent=1 // pred_region
      %v60 = vld [vmem:[#allocation2] sm:$0x3]
      %v61 = vmul.f32 %v60, 0.125
      %62 = vst.msk [vmem:[#allocation6] sm:$0x3] %vm55, %v61
    $region17: #{tpu_custom_call.1} parent=1 // pred_fallthru
      _
    // Predicated region
    $region18: #{tpu_custom_call.1} parent=1 // pred_check
      _
    $region19: #{tpu_custom_call.1} parent=1 // pred_check_branch
      %64 = sbr.rel (0) target = $region21
    $region20: #{tpu_custom_call.1} parent=1 // pred_region
      %66 = vsyncadd [#allocation5], 0
      %s68 = sshll.u32 [#allocation6], 4
      %s69 = int_to_ptr.vmem [resolvable:$true] %s68
      %s70 = sshll.u32 %s1, 4
      %s71 = int_to_ptr.hbm [resolvable:$true] %s70
      %73 = dma.vmem_to_hbm [thread:$0]  %s69, 32, %s71, [#allocation5]
    $region21: #{tpu_custom_call.1} parent=1 // pred_fallthru
      _
    // Predicated region
    $region22: #{tpu_custom_call.1} parent=1 // pred_check
      _
    $region23: #{tpu_custom_call.1} parent=1 // pred_check_branch
      %75 = sbr.rel (0) target = $region25
    $region24: #{tpu_custom_call.1} parent=1 // pred_region
      %77 = dma.done [#allocation5], 32
    $region25: #{tpu_custom_call.1} parent=1 // pred_fallthru
      _
    %78 = vsyncpa [#allocation4], 1
    %79 = vsyncpa [#allocation5], 1

</llo_original>
